<compile_context>
chip_gen: v7x
topology: tpu7x:2x2x1
jax: 0.10.0
libtpu: 0.0.40
codegen_flags: <defaults>
</compile_context>

<pallas_src>
import functools

import jax
import jax.numpy as jnp
from jax.experimental import pallas as pl
from jax.experimental.pallas import tpu as pltpu


def _dropout_linear_kernel(x_ref, w_ref, b_ref, r_ref, o_ref, *, p, matmul_dtype):
    # Linear: o = x @ W + b   (MXU matmul, f32 accumulation)
    a = x_ref[...].astype(matmul_dtype)
    w = w_ref[...].astype(matmul_dtype)
    o = jnp.dot(a, w, preferred_element_type=jnp.float32)
    o = o + b_ref[...].astype(jnp.float32)  # bias broadcast over rows

    if p > 0.0:
        # Inverted dropout (training=True): keep with prob (1-p), scale 1/(1-p).
        threshold = jnp.uint32(int(p * (2 ** 32)))
        keep = r_ref[...] >= threshold
        scale = jnp.float32(1.0 / (1.0 - p))
        o = jnp.where(keep, o * scale, jnp.float32(0.0))

    o_ref[...] = o.astype(o_ref.dtype)


def _pick_tile(dim, target, multiple):
    """Largest tile <= target that divides dim and is a multiple of `multiple`;
    falls back to the full dim (single block) when nothing fits."""
    if dim <= target:
        return dim
    t = (target // multiple) * multiple
    while t >= multiple:
        if dim % t == 0:
            return t
        t -= multiple
    return dim


def dropout_linear(x, w, b, rng_key, p, *, tile_m=256, tile_n=256,
                   matmul_dtype=jnp.float32, out_dtype=None):
    """x: [M, K], w: [K, N], b: [1, N].  Returns dropout(x @ w + b, p)."""
    assert 0.0 <= p < 1.0, "p must be in [0, 1) for the training-mode forward"
    M, K = x.shape
    K2, N = w.shape
    assert K == K2 and b.shape == (1, N)
    out_dtype = out_dtype or x.dtype

    # Per-element dropout bits, generated host-side (portable, no per-tile
    # seed correlation) and tiled into the kernel alongside the output block.
    rbits = jax.random.bits(rng_key, (M, N), dtype=jnp.uint32)

    tm = _pick_tile(M, tile_m, 8)     # sublane multiple
    tn = _pick_tile(N, tile_n, 128)   # lane-dense output tiles
    grid = (N // tn, M // tm)         # M innermost -> W tile reused across it

    kernel = functools.partial(_dropout_linear_kernel, p=p,
                               matmul_dtype=matmul_dtype)

    cost = pl.CostEstimate(
        flops=2 * M * K * N,
        bytes_accessed=(x.size * x.dtype.itemsize
                        + w.size * w.dtype.itemsize
                        + b.size * b.dtype.itemsize
                        + rbits.size * 4
                        + M * N * jnp.dtype(out_dtype).itemsize),
        transcendentals=0,
    )

    return pl.pallas_call(
        kernel,
        out_shape=jax.ShapeDtypeStruct((M, N), out_dtype),
        grid_spec=pltpu.PrefetchScalarGridSpec(
            num_scalar_prefetch=0,
            grid=grid,
            in_specs=[
                pl.BlockSpec((tm, K), lambda j, i: (i, 0)),   # x
                pl.BlockSpec((K, tn), lambda j, i: (0, j)),   # W (constant over i)
                pl.BlockSpec((1, tn), lambda j, i: (0, j)),   # bias
                pl.BlockSpec((tm, tn), lambda j, i: (i, j)),  # random bits
            ],
            out_specs=pl.BlockSpec((tm, tn), lambda j, i: (i, j)),
        ),
        compiler_params=pltpu.CompilerParams(
            dimension_semantics=("parallel", "parallel"),
        ),
        cost_estimate=cost,
    )(x, w, b, rbits)


if __name__ == "__main__":
    # Small shapes consistent with the module: Linear(hidden=32 -> 32), batch=8.
    M, K, N = 8, 32, 32
    P = 0.5

    key = jax.random.PRNGKey(0)
    kx, kw, kb, kd = jax.random.split(key, 4)
    x = jax.random.normal(kx, (M, K), dtype=jnp.float32)
    # Deterministic "parameter init" for the wrapped nn.Linear (already [K, N]).
    w = jax.random.normal(kw, (K, N), dtype=jnp.float32) * 0.1
    b = jax.random.normal(kb, (1, N), dtype=jnp.float32) * 0.1

    # Note: on v6e/v7x at production sizes, pass matmul_dtype=jnp.bfloat16 for
    # 2-3x MXU throughput (f32 accumulation preserved).
    out = dropout_linear(x, w, b, kd, P, matmul_dtype=jnp.float32)
    out = jax.block_until_ready(out)

    # Sanity: surviving elements equal (x @ W + b) / (1 - p); dropped are 0.
    ref = x @ w + b
    kept = out != 0.0
    assert out.shape == (M, N) and bool(jnp.all(jnp.isfinite(out)))
    assert bool(kept.any()) and bool((~kept).any())
    assert jnp.allclose(jnp.where(kept, out, 0.0),
                        jnp.where(kept, ref / (1.0 - P), 0.0),
                        atol=1e-4, rtol=1e-4)

    print("KERNEL_OK")
</pallas_src>

<mosaic_0001>
module attributes {stable_mosaic.version = 11 : i64} {
  func.func @_dropout_linear_kernel(%arg0: i32, %arg1: i32, %arg2: memref<8x32xf32, #tpu.memory_space<vmem>>, %arg3: memref<32x32xf32, #tpu.memory_space<vmem>>, %arg4: memref<1x32xf32, #tpu.memory_space<vmem>>, %arg5: memref<8x32xi32, #tpu.memory_space<vmem>>, %arg6: memref<8x32xf32, #tpu.memory_space<vmem>>) attributes {dimension_semantics = [#tpu.dimension_semantics<parallel>, #tpu.dimension_semantics<parallel>], iteration_bounds = array<i64: 1, 1>, scalar_prefetch = 0 : i64, scratch_operands = 0 : i64, tpu.core_type = #tpu.core_type<tc>, window_params = [{transform_indices = @transform_0, window_bounds = array<i64: 8, 32>}, {transform_indices = @transform_1, window_bounds = array<i64: 32, 32>}, {transform_indices = @transform_2, window_bounds = array<i64: 1, 32>}, {transform_indices = @transform_3, window_bounds = array<i64: 8, 32>}, {transform_indices = @transform_4, window_bounds = array<i64: 8, 32>}]} {
    %c0 = arith.constant 0 : index
    %c0_0 = arith.constant 0 : index
    %0 = vector.load %arg2[%c0, %c0_0] : memref<8x32xf32, #tpu.memory_space<vmem>>, vector<8x32xf32>
    %c0_1 = arith.constant 0 : index
    %c0_2 = arith.constant 0 : index
    %1 = vector.load %arg3[%c0_1, %c0_2] : memref<32x32xf32, #tpu.memory_space<vmem>>, vector<32x32xf32>
    %cst = arith.constant dense<0.000000e+00> : vector<8x32xf32>
    %2 = tpu.matmul %0, %1, %cst {dimension_numbers = #tpu.dot_dimension_numbers<[1], [0], [0], [1], [0, 0, 1, 1], [], []>} : vector<8x32xf32>, vector<32x32xf32>, vector<8x32xf32> -> vector<8x32xf32>
    %c0_3 = arith.constant 0 : index
    %c0_4 = arith.constant 0 : index
    %3 = vector.load %arg4[%c0_3, %c0_4] : memref<1x32xf32, #tpu.memory_space<vmem>>, vector<1x32xf32>
    %4 = vector.broadcast %3 : vector<1x32xf32> to vector<8x32xf32>
    %5 = arith.addf %2, %4 : vector<8x32xf32>
    %c0_5 = arith.constant 0 : index
    %c0_6 = arith.constant 0 : index
    %6 = vector.load %arg5[%c0_5, %c0_6] : memref<8x32xi32, #tpu.memory_space<vmem>>, vector<8x32xi32>
    %c-2147483648_i32 = arith.constant -2147483648 : i32
    %7 = vector.broadcast %c-2147483648_i32 : i32 to vector<8x32xi32>
    %8 = arith.cmpi uge, %6, %7 : vector<8x32xi32>
    %cst_7 = arith.constant 2.000000e+00 : f32
    %9 = vector.broadcast %cst_7 : f32 to vector<8x32xf32>
    %10 = arith.mulf %5, %9 : vector<8x32xf32>
    %cst_8 = arith.constant 0.000000e+00 : f32
    %11 = vector.broadcast %cst_8 : f32 to vector<8x32xf32>
    %12 = arith.select %8, %10, %11 : vector<8x32xi1>, vector<8x32xf32>
    %c0_9 = arith.constant 0 : index
    %c0_10 = arith.constant 0 : index
    %13 = vector.load %arg6[%c0_9, %c0_10] : memref<8x32xf32, #tpu.memory_space<vmem>>, vector<8x32xf32>
    tpu.vector_store %arg6[%c0_9, %c0_10], %12 {strides = array<i32>} : memref<8x32xf32, #tpu.memory_space<vmem>>, vector<8x32xf32>,
    return
  }
  func.func @transform_0(%arg0: i32, %arg1: i32) -> (i32, i32) {
    %c0_i32 = arith.constant 0 : i32
    %c0_i32_0 = arith.constant 0 : i32
    return %arg1, %c0_i32 : i32, i32
  }
  func.func @transform_1(%arg0: i32, %arg1: i32) -> (i32, i32) {
    %c0_i32 = arith.constant 0 : i32
    %c0_i32_0 = arith.constant 0 : i32
    return %c0_i32, %arg0 : i32, i32
  }
  func.func @transform_2(%arg0: i32, %arg1: i32) -> (i32, i32) {
    %c0_i32 = arith.constant 0 : i32
    %c0_i32_0 = arith.constant 0 : i32
    return %c0_i32, %arg0 : i32, i32
  }
  func.func @transform_3(%arg0: i32, %arg1: i32) -> (i32, i32) {
    %c0_i32 = arith.constant 0 : i32
    return %arg1, %arg0 : i32, i32
  }
  func.func @transform_4(%arg0: i32, %arg1: i32) -> (i32, i32) {
    %c0_i32 = arith.constant 0 : i32
    return %arg1, %arg0 : i32, i32
  }
}

</mosaic_0001>

<llo_original>
// kernel: tpu_custom_call.1
$region0: #{tpu_custom_call.1}
  #allocation0 [shape = 'u32[]', space=smem, size = 0x4, offset = 0x4, fixed_abs, tag = 'smem constant byte address 0x4 - core index']
  #allocation1 [shape = 'u32[144,128]{1,0:T(1,128)}', space=vmem, size = 0x12000, scoped, tag = 'internal scratch']
  %s0 = inlined_call_operand.hbm [shape: f32[8,32], index: 0, kind: input, shape index: {}]
  %s1 = inlined_call_operand.hbm [shape: f32[32,32], index: 1, kind: input, shape index: {}]
  %s2 = inlined_call_operand.vmem [shape: f32[1,32], index: 2, kind: input, shape index: {}]
  %s3 = inlined_call_operand.vmem [shape: u32[8,32], index: 3, kind: input, shape index: {}]
  %s4 = inlined_call_operand.hbm [shape: f32[8,32], index: 4, kind: output, shape index: {}]
  %s5 = sld [smem:[#allocation0]]
  $region34: #{tpu_custom_call.1} parent=0
    _
  %s7 = ssub.s32 1, %s5
  %s8 = scalar_select 0, %s7, %s5
  $region1: #{tpu_custom_call.1} parent=0
    #allocation2 [shape = 'u8[4096]{0}', space=vmem, size = 0x1000, scoped, tag = 'input window, operand 0, single buffered']
    #allocation3 [shape = 's32[1]{0}', space=sflag, size = 0x4, scoped, tag = 'scoped memory for tpu_custom_call.1']
    #allocation4 [shape = 's32[1]{0}', space=sflag, size = 0x4, scoped, tag = 'scoped memory for tpu_custom_call.1']
    #allocation5 [shape = 'u8[16384]{0}', space=vmem, size = 0x4000, scoped, tag = 'input window, operand 1, single buffered']
    #allocation6 [shape = 's32[1]{0}', space=sflag, size = 0x4, scoped, tag = 'scoped memory for tpu_custom_call.1']
    #allocation7 [shape = 'u8[4096]{0}', space=vmem, size = 0x1000, scoped, tag = 'output window, operand 0, single buffered']
    %9 = vsyncpa [#allocation3], 0
    %10 = vsyncpa [#allocation6], 0
    %11 = vsyncpa [#allocation4], 0
    // Predicated region
    $region2: #{tpu_custom_call.1} parent=1 // pred_check
      _
    $region3: #{tpu_custom_call.1} parent=1 // pred_check_branch
      %13 = sbr.rel (0) target = $region5
    $region4: #{tpu_custom_call.1} parent=1 // pred_region
      %s15 = ssub.s32 128, 128
      %16 = vsyncadd [#allocation3], %s15
      %s18 = sshll.u32 [#allocation2], 4
      %s19 = int_to_ptr.vmem [resolvable:$true] %s18
      %21 = dma.hbm_to_vmem [thread:$0]  %s0, 128, %s19, [#allocation3]
    $region5: #{tpu_custom_call.1} parent=1 // pred_fallthru
      _
    // Predicated region
    $region6: #{tpu_custom_call.1} parent=1 // pred_check
      _
    $region7: #{tpu_custom_call.1} parent=1 // pred_check_branch
      %23 = sbr.rel (0) target = $region9
    $region8: #{tpu_custom_call.1} parent=1 // pred_region
      %s25 = ssub.s32 512, 512
      %26 = vsyncadd [#allocation6], %s25
      %s27 = sshll.u32 [#allocation5], 4
      %s28 = int_to_ptr.vmem [resolvable:$true] %s27
      %33 = dma.hbm_to_vmem [thread:$0]  %s1, 512, %s28, [#allocation6], 128, 128, 8
    $region9: #{tpu_custom_call.1} parent=1 // pred_fallthru
      _
    // Predicated region
    $region10: #{tpu_custom_call.1} parent=1 // pred_check
      _
    $region11: #{tpu_custom_call.1} parent=1 // pred_check_branch
      %35 = sbr.rel (0) target = $region13
    $region12: #{tpu_custom_call.1} parent=1 // pred_region
      _
    $region13: #{tpu_custom_call.1} parent=1 // pred_fallthru
      _
    // Predicated region
    $region14: #{tpu_custom_call.1} parent=1 // pred_check
      _
    $region15: #{tpu_custom_call.1} parent=1 // pred_check_branch
      %37 = sbr.rel (0) target = $region17
    $region16: #{tpu_custom_call.1} parent=1 // pred_region
      _
    $region17: #{tpu_custom_call.1} parent=1 // pred_fallthru
      _
    // Predicated region
    $region18: #{tpu_custom_call.1} parent=1 // pred_check
      _
    $region19: #{tpu_custom_call.1} parent=1 // pred_check_branch
      %39 = sbr.rel (0) target = $region21
    $region20: #{tpu_custom_call.1} parent=1 // pred_region
      %40 = dma.done [#allocation3], 128
    $region21: #{tpu_custom_call.1} parent=1 // pred_fallthru
      _
    // Predicated region
    $region22: #{tpu_custom_call.1} parent=1 // pred_check
      _
    $region23: #{tpu_custom_call.1} parent=1 // pred_check_branch
      %42 = sbr.rel (0) target = $region25
    $region24: #{tpu_custom_call.1} parent=1 // pred_region
      %43 = dma.done [#allocation6], 512
    $region25: #{tpu_custom_call.1} parent=1 // pred_fallthru
      _
    %v44 = vld [vmem:[#allocation2] sm:$0xff]
    %v45 = vld [vmem:[#allocation5] sm:$0xff]
    %v46 = vld [vmem:[#allocation5 + $0x8] sm:$0xff]
    %v47 = vld [vmem:[#allocation5 + $0x10] sm:$0xff]
    %v48 = vld [vmem:[#allocation5 + $0x18] sm:$0xff]
    %v49 = vld [vmem:[%s2] sm:$0x1]
    %v51 = vlaneseq
    %v52 = vshrl.u32 %v51, 7
    %v53 = vsub.s32 0, %v52
    %v54 = vrot.slane %v49, %v53
    %vm56 = vcmask 261120
    %v58 = vsel %vm56, %v44, 0
    %60 = vmatprep.subr.mxu0 0.0
    %61 = vmatpush1.msra.mxu0 %v45
    %62 = vmatprep.subr.mxu0 0.0
    %63 = vmatpush1.msra.mxu0 %v46
    %64 = vmatprep.subr.mxu0 0.0
    %65 = vmatpush1.msra.mxu0 %v47
    %66 = vmatprep.subr.mxu0 0.0
    %67 = vmatpush1.msra.mxu0 %v48
    %68 = vmatprep.subr.mxu0 0.0
    %69 = vmatpush1.msra.mxu0 0.0
    %70 = vmatprep.subr.mxu0 0.0
    %71 = vmatpush1.msra.mxu0 0.0
    %72 = vmatprep.subr.mxu0 0.0
    %73 = vmatpush1.msra.mxu0 0.0
    %74 = vmatprep.subr.mxu0 0.0
    %75 = vmatpush1.msra.mxu0 0.0
    %76 = vmatprep.subr.mxu0 0.0
    %77 = vmatpush1.msra.mxu0 0.0
    %78 = vmatprep.subr.mxu0 0.0
    %79 = vmatpush1.msra.mxu0 0.0
    %80 = vmatprep.subr.mxu0 0.0
    %81 = vmatpush1.msra.mxu0 0.0
    %82 = vmatprep.subr.mxu0 0.0
    %83 = vmatpush1.msra.mxu0 0.0
    %84 = vmatprep.subr.mxu0 0.0
    %85 = vmatpush1.msra.mxu0 0.0
    %86 = vmatprep.subr.mxu0 0.0
    %87 = vmatpush1.msra.mxu0 0.0
    %88 = vmatprep.subr.mxu0 0.0
    %89 = vmatpush1.msra.mxu0 0.0
    %90 = vmatprep.subr.mxu0 0.0
    %91 = vmatpush1.msra.mxu0 0.0
    %92 = vmatprep.subr.mxu0 0.0
    %93 = vmatpush1.msra.mxu0 0.0
    %94 = vmatprep.subr.mxu0 0.0
    %95 = vmatpush1.msra.mxu0 0.0
    %96 = vmatprep.subr.mxu0 0.0
    %97 = vmatpush1.msra.mxu0 0.0
    %98 = vmatprep.subr.mxu0 0.0
    %99 = vmatpush1.msra.mxu0 0.0
    %100 = vmatprep.subr.mxu0 0.0
    %101 = vmatpush1.msra.mxu0 0.0
    %102 = vmatprep.subr.mxu0 0.0
    %103 = vmatpush1.msra.mxu0 0.0
    %104 = vmatprep.subr.mxu0 0.0
    %105 = vmatpush1.msra.mxu0 0.0
    %106 = vmatprep.subr.mxu0 0.0
    %107 = vmatpush1.msra.mxu0 0.0
    %108 = vmatprep.subr.mxu0 0.0
    %109 = vmatpush1.msra.mxu0 0.0
    %110 = vmatprep.subr.mxu0 0.0
    %111 = vmatpush1.msra.mxu0 0.0
    %112 = vmatprep.subr.mxu0 0.0
    %113 = vmatpush1.msra.mxu0 0.0
    %114 = vmatprep.subr.mxu0 0.0
    %115 = vmatpush1.msra.mxu0 0.0
    %116 = vmatprep.subr.mxu0 0.0
    %117 = vmatpush1.msra.mxu0 0.0
    %118 = vmatprep.subr.mxu0 0.0
    %119 = vmatpush1.msra.mxu0 0.0
    %120 = vmatprep.subr.mxu0 0.0
    %121 = vmatpush1.msra.mxu0 0.0
    %122 = vmatprep.subr.mxu0 0.0
    %123 = vmatpush1.msra.mxu0 0.0
    %124 = vmatprep.mubr.f32.mxu0 0.0
    %125 = vmatmul.mubr.f32.gmra.mrb[0].mxu0 %v58
    %v126 = vpop.f32.mrb[0].mxu0
    %v127 = vadd.f32 %v54, %v126
    %v128 = vpop.f32.mrb[0].mxu0
    %129 = vdwg.mxu0
    %v130 = vld [vmem:[%s3] sm:$0xff]
    %vm131 = vcmp.ge.u32.totalorder %v130, 2147483648
    %v132 = vmul.f32 %v127, 2.0
    %v133 = vsel %vm131, %v132, 0.0
    %134 = vst.msk [vmem:[#allocation7] sm:$0xff] %vm56, %v133
    // Predicated region
    $region26: #{tpu_custom_call.1} parent=1 // pred_check
      _
    $region27: #{tpu_custom_call.1} parent=1 // pred_check_branch
      %136 = sbr.rel (0) target = $region29
    $region28: #{tpu_custom_call.1} parent=1 // pred_region
      %s138 = ssub.s32 128, 128
      %139 = vsyncadd [#allocation4], %s138
      %s141 = sshll.u32 [#allocation7], 4
      %s142 = int_to_ptr.vmem [resolvable:$true] %s141
      %144 = dma.vmem_to_hbm [thread:$0]  %s142, 128, %s4, [#allocation4]
    $region29: #{tpu_custom_call.1} parent=1 // pred_fallthru
      _
    // Predicated region
    $region30: #{tpu_custom_call.1} parent=1 // pred_check
      _
    $region31: #{tpu_custom_call.1} parent=1 // pred_check_branch
      %146 = sbr.rel (0) target = $region33
    $region32: #{tpu_custom_call.1} parent=1 // pred_region
      %147 = dma.done [#allocation4], 128
    $region33: #{tpu_custom_call.1} parent=1 // pred_fallthru
      _
    %148 = vsyncpa [#allocation3], 1
    %149 = vsyncpa [#allocation6], 1
    %150 = vsyncpa [#allocation4], 1

</llo_original>
